<compile_context>
chip_gen: v5e
topology: v5e:2x2
jax: 0.10.0
libtpu: 0.0.40
codegen_flags: <defaults>
</compile_context>

<pallas_src>
import functools
import math

import jax
import jax.numpy as jnp
import numpy as np
from jax.experimental import pallas as pl
from jax.experimental.pallas import tpu as pltpu


# ---------------------------------------------------------------------------
# Generation-aware VMEM limit (v5e/v6e: 128 MiB physical, v7x: 64 MiB).
# ---------------------------------------------------------------------------
def _vmem_limit_bytes():
    phys = 64 * 1024 * 1024
    try:
        info = pltpu.get_tpu_info()
        phys = int(getattr(info, "vmem_capacity_bytes", phys) or phys)
    except Exception:
        pass
    # Leave headroom for the compiler's internal scratch; clamp to sane range.
    return int(max(32 * 1024 * 1024, min(phys * 3 // 4, 96 * 1024 * 1024)))


_VMEM_LIMIT = _vmem_limit_bytes()


def _sublane(dtype):
    """dtype-aware sublane multiple (packed sublanes for sub-32-bit dtypes)."""
    itemsize = jnp.dtype(dtype).itemsize
    if itemsize == 2:
        return 16
    if itemsize == 1:
        return 32
    return 8


def _tile(total, target, multiple):
    """Largest tile <= target that divides `total` and is a multiple of
    `multiple`; falls back to the full extent (always legal per the
    (8,128)-or-full-dim BlockSpec rule)."""
    if total <= target:
        return total
    t = (target // multiple) * multiple
    while t >= multiple:
        if total % t == 0:
            return t
        t -= multiple
    return total


def _pick_head_group(H, dh):
    """Smallest divisor Hb of H such that Hb*dh is a multiple of 128 (lane
    dense output block); fall back to all heads (block == full D)."""
    for hb in range(1, H + 1):
        if H % hb == 0 and (hb * dh) % 128 == 0:
            return hb
    return H


# ---------------------------------------------------------------------------
# Linear: y = x @ w_t + b   (w_t already transposed to (K, N) in the wrapper)
# ---------------------------------------------------------------------------
def _linear_kernel(x_ref, wt_ref, b_ref, o_ref):
    acc = jnp.dot(x_ref[...], wt_ref[...], preferred_element_type=jnp.float32)
    o_ref[...] = (acc + b_ref[...].astype(jnp.float32)).astype(o_ref.dtype)


def _linear(x, w_t, b, *, row_tile=512, col_tile=256):
    M, K = x.shape
    K2, N = w_t.shape
    assert K == K2
    sub = _sublane(x.dtype)
    itemsize = jnp.dtype(x.dtype).itemsize

    tm = _tile(M, row_tile, sub)
    tn = _tile(N, col_tile, 128)

    # Shrink tiles if the double-buffered working set would blow the budget.
    budget = int(_VMEM_LIMIT * 0.6)

    def footprint(tm_, tn_):
        return 2 * (tm_ * K + K * tn_ + tn_ + tm_ * tn_) * itemsize

    prev = None
    while footprint(tm, tn) > budget and (tm, tn) != prev:
        prev = (tm, tn)
        if tm * K >= K * tn and tm > sub:
            tm = _tile(M, max(sub, tm // 2), sub)
        elif tn > 128:
            tn = _tile(N, max(128, tn // 2), 128)

    gi, gj = M // tm, N // tn
    b2 = b.reshape(1, N)

    # Grid ordering: the operand whose block index only depends on the OUTER
    # grid axis is streamed from HBM once; the other is re-streamed
    # (outer-extent) times.  Pick the cheaper ordering.
    cost_j_inner = M * K + gi * K * N   # weight re-read per row tile
    cost_i_inner = K * N + gj * M * K   # activation re-read per col tile
    if cost_j_inner <= cost_i_inner:
        grid = (gi, gj)
        x_map = lambda i, j: (i, 0)
        w_map = lambda i, j: (0, j)
        b_map = lambda i, j: (0, j)
        o_map = lambda i, j: (i, j)
    else:
        grid = (gj, gi)
        x_map = lambda j, i: (i, 0)
        w_map = lambda j, i: (0, j)
        b_map = lambda j, i: (0, j)
        o_map = lambda j, i: (i, j)

    return pl.pallas_call(
        _linear_kernel,
        out_shape=jax.ShapeDtypeStruct((M, N), x.dtype),
        grid=grid,
        in_specs=[
            pl.BlockSpec((tm, K), x_map),   # activation row tile (full K)
            pl.BlockSpec((K, tn), w_map),   # pre-transposed weight tile
            pl.BlockSpec((1, tn), b_map),   # bias slice
        ],
        out_specs=pl.BlockSpec((tm, tn), o_map),
        compiler_params=pltpu.CompilerParams(
            dimension_semantics=("parallel", "parallel"),
            vmem_limit_bytes=_VMEM_LIMIT),
    )(x, w_t, b2)


# ---------------------------------------------------------------------------
# Flash attention, grid = (B, head_groups, q_tiles, kv_tiles), Hb heads/step.
# Output written directly in (B, S, D) layout (lane-dense blocks).
# ---------------------------------------------------------------------------
def _flash_kernel(q_ref, k_ref, v_ref, o_ref, qs_sc, m_sc, l_sc, acc_sc, *,
                  scale, causal, tq, tk, dh, Hb):
    qi = pl.program_id(2)
    ki = pl.program_id(3)
    nk = pl.num_programs(3)

    @pl.when(ki == 0)
    def _init():
        # Hoist the 1/sqrt(dh) scale out of the per-kv-tile body (paid once
        # per q tile instead of nk times).
        qs_sc[...] = (q_ref[0] * scale).astype(qs_sc.dtype)
        m_sc[...] = jnp.full(m_sc.shape, -jnp.inf, dtype=jnp.float32)
        l_sc[...] = jnp.zeros(l_sc.shape, dtype=jnp.float32)
        acc_sc[...] = jnp.zeros(acc_sc.shape, dtype=jnp.float32)

    def _compute():
        q = qs_sc[...]          # (Hb, tq, dh), input dtype, pre-scaled
        k = k_ref[0]            # (Hb, tk, dh)
        v = v_ref[0]            # (Hb, tk, dh)

        # s[h] = q[h] @ k[h]^T  (batched over Hb heads, no in-kernel transpose)
        s = jax.lax.dot_general(
            q, k, (((2,), (2,)), ((0,), (0,))),
            preferred_element_type=jnp.float32)          # (Hb, tq, tk)

        if causal:
            # PyTorch masks with -inf before scaling; -inf * scale == -inf, so
            # masking the (scale-folded) scores is equivalent.  The mask is
            # identical across heads -> build it 2-D and broadcast.
            row = qi * tq + jax.lax.broadcasted_iota(jnp.int32, (tq, tk), 0)
            col = ki * tk + jax.lax.broadcasted_iota(jnp.int32, (tq, tk), 1)
            s = jnp.where((col > row)[None, :, :], -jnp.inf, s)

        m_prev = m_sc[...]
        m_new = jnp.maximum(m_prev, jnp.max(s, axis=-1, keepdims=True))
        alpha = jnp.exp(m_prev - m_new)
        p = jnp.exp(s - m_new)
        l_sc[...] = alpha * l_sc[...] + jnp.sum(p, axis=-1, keepdims=True)
        acc_sc[...] = alpha * acc_sc[...] + jax.lax.dot_general(
            p.astype(v.dtype), v, (((2,), (1,)), ((0,), (0,))),
            preferred_element_type=jnp.float32)          # (Hb, tq, dh)
        m_sc[...] = m_new

    if causal:
        # Skip kv tiles entirely above the diagonal for this q tile.  The K/V
        # index_map is clamped in the wrapper so these tiles are not re-DMA'd.
        pl.when(ki * tk <= qi * tq + (tq - 1))(_compute)
    else:
        _compute()

    @pl.when(ki == nk - 1)
    def _finalize():
        inv = 1.0 / l_sc[...]                            # exact reciprocal
        out = (acc_sc[...] * inv).astype(o_ref.dtype)    # (Hb, tq, dh)
        # Assemble the lane-dense (tq, Hb*dh) output block in head order.
        o_ref[0] = jnp.concatenate([out[j] for j in range(Hb)], axis=-1)


def _flash_attention(q, k, v, *, causal, scale, q_tile=256, kv_tile=256):
    B, H, S, dh = q.shape
    dtype = q.dtype
    sub = _sublane(dtype)

    Hb = _pick_head_group(H, dh)
    G = H // Hb
    Dg = Hb * dh
    D = H * dh

    # Cap the per-step f32 score footprint (Hb, tq, tk) to limit vreg spills.
    max_score_elems = 1 * 1024 * 1024    # 4 MiB of f32
    qt, kt = q_tile, kv_tile
    while Hb * qt * kt > max_score_elems and kt > 128:
        kt //= 2
    while Hb * qt * kt > max_score_elems and qt > 128:
        qt //= 2

    tq = _tile(S, qt, sub)
    tk = _tile(S, kt, 128) if S % 128 == 0 else _tile(S, kt, sub)
    nq, nk = S // tq, S // tk

    if causal:
        def kv_map(b, g, qi, ki):
            # Clamp fully-masked kv tiles to the last allowed block so Pallas
            # skips their HBM DMA (compute is skipped by pl.when in-kernel).
            last = (qi * tq + (tq - 1)) // tk
            return (b, g, jnp.minimum(ki, last), 0)
    else:
        def kv_map(b, g, qi, ki):
            return (b, g, ki, 0)

    kernel = functools.partial(_flash_kernel, scale=scale, causal=causal,
                               tq=tq, tk=tk, dh=dh, Hb=Hb)

    return pl.pallas_call(
        kernel,
        out_shape=jax.ShapeDtypeStruct((B, S, D), dtype),
        grid=(B, G, nq, nk),
        in_specs=[
            pl.BlockSpec((1, Hb, tq, dh), lambda b, g, qi, ki: (b, g, qi, 0)),
            pl.BlockSpec((1, Hb, tk, dh), kv_map),
            pl.BlockSpec((1, Hb, tk, dh), kv_map),
        ],
        # Output directly in (B, S, D) layout: block (1, tq, Hb*dh) at column
        # block g -> no post-attention transpose in the wrapper.
        out_specs=pl.BlockSpec((1, tq, Dg), lambda b, g, qi, ki: (b, qi, g)),
        scratch_shapes=[
            pltpu.VMEM((Hb, tq, dh), dtype),        # pre-scaled q
            pltpu.VMEM((Hb, tq, 1), jnp.float32),   # running max m_i
            pltpu.VMEM((Hb, tq, 1), jnp.float32),   # running sum l_i
            pltpu.VMEM((Hb, tq, dh), jnp.float32),  # output accumulator (f32)
        ],
        compiler_params=pltpu.CompilerParams(
            dimension_semantics=("parallel", "parallel", "parallel", "arbitrary"),
            vmem_limit_bytes=_VMEM_LIMIT),
    )(q, k, v)


# ---------------------------------------------------------------------------
# Full SelfAttention forward (matches the PyTorch module).
# ---------------------------------------------------------------------------
def self_attention(x, w_in, b_in, w_out, b_out, *, n_heads, causal=False,
                   q_tile=256, kv_tile=256, row_tile=512, col_tile=256):
    B, S, D = x.shape
    assert D % n_heads == 0
    dh = D // n_heads

    # Pre-transpose weights once in the wrapper (no in-kernel XLU transpose).
    w_in_t = jnp.transpose(w_in)     # (D, 3D)
    w_out_t = jnp.transpose(w_out)   # (D, D)

    # in_proj
    qkv = _linear(x.reshape(B * S, D), w_in_t, b_in,
                  row_tile=row_tile, col_tile=col_tile)          # (B*S, 3D)

    # Split chunks and heads.  The output-side transpose is gone (flash writes
    # (B, S, D) directly); only the q/k/v head-split transposes remain in XLA.
    # TODO(synk): fuse the q/k/v split into the flash in_specs once per-row DMA
    # size (Hb*dh*itemsize >= ~512 B) is guaranteed for the target configs.
    qkv = qkv.reshape(B, S, 3, n_heads, dh)
    q = jnp.transpose(qkv[:, :, 0], (0, 2, 1, 3))                # (B, H, S, dh)
    k = jnp.transpose(qkv[:, :, 1], (0, 2, 1, 3))
    v = jnp.transpose(qkv[:, :, 2], (0, 2, 1, 3))

    attn = _flash_attention(q, k, v, causal=causal, scale=1.0 / math.sqrt(dh),
                            q_tile=q_tile, kv_tile=kv_tile)      # (B, S, D)

    # out_proj (reshape is free: attn is already (B, S, D) row-major).
    out = _linear(attn.reshape(B * S, D), w_out_t, b_out,
                  row_tile=row_tile, col_tile=col_tile)
    return out.reshape(B, S, D)


# ---------------------------------------------------------------------------
# Pure-JAX reference mirroring the PyTorch module (f32).
# ---------------------------------------------------------------------------
def reference_self_attention(x, w_in, b_in, w_out, b_out, *, n_heads, causal=False):
    B, S, D = x.shape
    dh = D // n_heads
    qkv = x @ w_in.T + b_in
    q, k, v = jnp.split(qkv, 3, axis=-1)
    q = q.reshape(B, S, n_heads, dh).transpose(0, 2, 1, 3)
    k = k.reshape(B, S, n_heads, dh).transpose(0, 2, 1, 3)
    v = v.reshape(B, S, n_heads, dh).transpose(0, 2, 1, 3)
    w = jnp.einsum("bhsd,bhtd->bhst", q, k)
    if causal:
        mask = jnp.triu(jnp.ones((S, S), dtype=bool), 1)
        w = jnp.where(mask, -jnp.inf, w)
    w = w / math.sqrt(dh)
    w = jax.nn.softmax(w, axis=-1)
    o = jnp.einsum("bhst,bhtd->bhsd", w, v)
    o = o.transpose(0, 2, 1, 3).reshape(B, S, D)
    return o @ w_out.T + b_out


if __name__ == "__main__":
    def run_case(B, S, D, H, dtype, atol, rtol):
        key = jax.random.PRNGKey(0)
        kx, k1, k2, k3, k4 = jax.random.split(key, 5)
        bound = 1.0 / math.sqrt(D)
        w_in = jax.random.uniform(k1, (3 * D, D), jnp.float32, -bound, bound)
        b_in = jax.random.uniform(k2, (3 * D,), jnp.float32, -bound, bound)
        w_out = jax.random.uniform(k3, (D, D), jnp.float32, -bound, bound)
        b_out = jax.random.uniform(k4, (D,), jnp.float32, -bound, bound)
        x = jax.random.normal(kx, (B, S, D), jnp.float32)

        xd, wi, bi, wo, bo = (a.astype(dtype) for a in (x, w_in, b_in, w_out, b_out))

        for causal in (False, True):
            out = self_attention(xd, wi, bi, wo, bo, n_heads=H, causal=causal)
            jax.block_until_ready(out)
            ref = reference_self_attention(x, w_in, b_in, w_out, b_out,
                                           n_heads=H, causal=causal)
            np.testing.assert_allclose(np.asarray(out, dtype=np.float32),
                                       np.asarray(ref), atol=atol, rtol=rtol)

    # Small shape consistent with the module: batch=2, seq=8, d_embed=32, 4 heads
    # (dh=8 -> all-heads grouping, full-extent tiles).
    run_case(2, 8, 32, 4, jnp.float32, 1e-4, 1e-4)
    # Multi-kv-tile shape: exercises online softmax across kv tiles, the causal
    # kv-tile skip + DMA clamp, and head grouping (dh=16 -> Hb=8, Dg=128).
    run_case(1, 512, 128, 8, jnp.float32, 1e-4, 1e-4)
    # bf16 activations: bf16 MXU operands, f32 softmax stats & accumulators,
    # dtype-aware (16-row) sublane tiling.
    run_case(2, 256, 128, 8, jnp.bfloat16, 5e-2, 5e-2)

    print("KERNEL_OK")
</pallas_src>

<mosaic_0001>
module attributes {stable_mosaic.version = 11 : i64} {
  func.func @_linear_kernel(%arg0: i32, %arg1: i32, %arg2: memref<16x32xf32, #tpu.memory_space<vmem>>, %arg3: memref<32x96xf32, #tpu.memory_space<vmem>>, %arg4: memref<1x96xf32, #tpu.memory_space<vmem>>, %arg5: memref<16x96xf32, #tpu.memory_space<vmem>>) attributes {dimension_semantics = [#tpu.dimension_semantics<parallel>, #tpu.dimension_semantics<parallel>], iteration_bounds = array<i64: 1, 1>, scalar_prefetch = 0 : i64, scratch_operands = 0 : i64, tpu.core_type = #tpu.core_type<tc>, window_params = [{transform_indices = @transform_0, window_bounds = array<i64: 16, 32>}, {transform_indices = @transform_1, window_bounds = array<i64: 32, 96>}, {transform_indices = @transform_2, window_bounds = array<i64: 1, 96>}, {transform_indices = @transform_3, window_bounds = array<i64: 16, 96>}]} {
    %c0 = arith.constant 0 : index
    %c0_0 = arith.constant 0 : index
    %0 = vector.load %arg2[%c0, %c0_0] : memref<16x32xf32, #tpu.memory_space<vmem>>, vector<16x32xf32>
    %c0_1 = arith.constant 0 : index
    %c0_2 = arith.constant 0 : index
    %1 = vector.load %arg3[%c0_1, %c0_2] : memref<32x96xf32, #tpu.memory_space<vmem>>, vector<32x96xf32>
    %cst = arith.constant dense<0.000000e+00> : vector<16x96xf32>
    %2 = tpu.matmul %0, %1, %cst {dimension_numbers = #tpu.dot_dimension_numbers<[1], [0], [0], [1], [0, 0, 1, 1], [], []>} : vector<16x32xf32>, vector<32x96xf32>, vector<16x96xf32> -> vector<16x96xf32>
    %c0_3 = arith.constant 0 : index
    %c0_4 = arith.constant 0 : index
    %3 = vector.load %arg4[%c0_3, %c0_4] : memref<1x96xf32, #tpu.memory_space<vmem>>, vector<1x96xf32>
    %4 = vector.broadcast %3 : vector<1x96xf32> to vector<16x96xf32>
    %5 = arith.addf %2, %4 : vector<16x96xf32>
    %c0_5 = arith.constant 0 : index
    %c0_6 = arith.constant 0 : index
    %6 = vector.load %arg5[%c0_5, %c0_6] : memref<16x96xf32, #tpu.memory_space<vmem>>, vector<16x96xf32>
    tpu.vector_store %arg5[%c0_5, %c0_6], %5 {strides = array<i32>} : memref<16x96xf32, #tpu.memory_space<vmem>>, vector<16x96xf32>,
    return
  }
  func.func @transform_0(%arg0: i32, %arg1: i32) -> (i32, i32) {
    %c0_i32 = arith.constant 0 : i32
    %c0_i32_0 = arith.constant 0 : i32
    return %arg0, %c0_i32 : i32, i32
  }
  func.func @transform_1(%arg0: i32, %arg1: i32) -> (i32, i32) {
    %c0_i32 = arith.constant 0 : i32
    %c0_i32_0 = arith.constant 0 : i32
    return %c0_i32, %arg1 : i32, i32
  }
  func.func @transform_2(%arg0: i32, %arg1: i32) -> (i32, i32) {
    %c0_i32 = arith.constant 0 : i32
    %c0_i32_0 = arith.constant 0 : i32
    return %c0_i32, %arg1 : i32, i32
  }
  func.func @transform_3(%arg0: i32, %arg1: i32) -> (i32, i32) {
    %c0_i32 = arith.constant 0 : i32
    return %arg0, %arg1 : i32, i32
  }
}

</mosaic_0001>

<llo_original>
// kernel: tpu_custom_call.1
$region0: #{tpu_custom_call.1}
  #allocation0 [shape = 'u32[]', space=smem, size = 0x4, offset = 0x4, fixed_abs, tag = 'smem constant byte address 0x4 - core index']
  #allocation1 [shape = 'u32[72,128]{1,0:T(1,128)}', space=vmem, size = 0x9000, scoped, tag = 'internal scratch']
  %s0 = inlined_call_operand.hbm [shape: f32[16,32], index: 0, kind: input, shape index: {}]
  %s1 = inlined_call_operand.hbm [shape: f32[32,96], index: 1, kind: input, shape index: {}]
  %s2 = inlined_call_operand.vmem [shape: f32[1,96], index: 2, kind: input, shape index: {}]
  %s3 = inlined_call_operand.hbm [shape: f32[16,96], index: 3, kind: output, shape index: {}]
  %s4 = sld [smem:[#allocation0]]
  $region30: #{tpu_custom_call.1} parent=0
    _
  %s6 = ssub.s32 1, %s4
  %s7 = scalar_select 0, %s6, %s4
  $region1: #{tpu_custom_call.1} parent=0
    #allocation2 [shape = 'u8[8192]{0}', space=vmem, size = 0x2000, scoped, tag = 'input window, operand 0, single buffered']
    #allocation3 [shape = 's32[1]{0}', space=sflag, size = 0x4, scoped, tag = 'scoped memory for tpu_custom_call.1']
    #allocation4 [shape = 's32[1]{0}', space=sflag, size = 0x4, scoped, tag = 'scoped memory for tpu_custom_call.1']
    #allocation5 [shape = 'u8[16384]{0}', space=vmem, size = 0x4000, scoped, tag = 'input window, operand 1, single buffered']
    #allocation6 [shape = 's32[1]{0}', space=sflag, size = 0x4, scoped, tag = 'scoped memory for tpu_custom_call.1']
    #allocation7 [shape = 'u8[8192]{0}', space=vmem, size = 0x2000, scoped, tag = 'output window, operand 0, single buffered']
    %8 = vsyncpa [#allocation3], 0
    %9 = vsyncpa [#allocation6], 0
    %10 = vsyncpa [#allocation4], 0
    // Predicated region
    $region2: #{tpu_custom_call.1} parent=1 // pred_check
      _
    $region3: #{tpu_custom_call.1} parent=1 // pred_check_branch
      %12 = sbr.rel (0) target = $region5
    $region4: #{tpu_custom_call.1} parent=1 // pred_region
      %14 = vsyncadd [#allocation3], 0
      %s15 = sshll.u32 %s0, 4
      %s16 = int_to_ptr.hbm [resolvable:$true] %s15
      %s17 = sshll.u32 [#allocation2], 4
      %s18 = int_to_ptr.vmem [resolvable:$true] %s17
      %23 = dma.hbm_to_vmem [thread:$0]  %s16, 256, %s18, [#allocation3], 128, 128, 8
    $region5: #{tpu_custom_call.1} parent=1 // pred_fallthru
      _
    // Predicated region
    $region6: #{tpu_custom_call.1} parent=1 // pred_check
      _
    $region7: #{tpu_custom_call.1} parent=1 // pred_check_branch
      %25 = sbr.rel (0) target = $region9
    $region8: #{tpu_custom_call.1} parent=1 // pred_region
      %27 = vsyncadd [#allocation6], 0
      %s28 = sshll.u32 %s1, 4
      %s29 = int_to_ptr.hbm [resolvable:$true] %s28
      %s30 = sshll.u32 [#allocation5], 4
      %s31 = int_to_ptr.vmem [resolvable:$true] %s30
      %36 = dma.hbm_to_vmem [thread:$0]  %s29, 512, %s31, [#allocation6], 128, 128, 8
    $region9: #{tpu_custom_call.1} parent=1 // pred_fallthru
      _
    // Predicated region
    $region10: #{tpu_custom_call.1} parent=1 // pred_check
      _
    $region11: #{tpu_custom_call.1} parent=1 // pred_check_branch
      %38 = sbr.rel (0) target = $region13
    $region12: #{tpu_custom_call.1} parent=1 // pred_region
      _
    $region13: #{tpu_custom_call.1} parent=1 // pred_fallthru
      _
    // Predicated region
    $region14: #{tpu_custom_call.1} parent=1 // pred_check
      _
    $region15: #{tpu_custom_call.1} parent=1 // pred_check_branch
      %40 = sbr.rel (0) target = $region17
    $region16: #{tpu_custom_call.1} parent=1 // pred_region
      %42 = dma.done [#allocation3], 256
    $region17: #{tpu_custom_call.1} parent=1 // pred_fallthru
      _
    // Predicated region
    $region18: #{tpu_custom_call.1} parent=1 // pred_check
      _
    $region19: #{tpu_custom_call.1} parent=1 // pred_check_branch
      %44 = sbr.rel (0) target = $region21
    $region20: #{tpu_custom_call.1} parent=1 // pred_region
      %46 = dma.done [#allocation6], 512
    $region21: #{tpu_custom_call.1} parent=1 // pred_fallthru
      _
    %v47 = vld [vmem:[#allocation2] sm:$0xff]
    %v48 = vld [vmem:[#allocation2 + $0x8] sm:$0xff]
    %v49 = vld [vmem:[#allocation5] sm:$0xff]
    %v50 = vld [vmem:[#allocation5 + $0x8] sm:$0xff]
    %v51 = vld [vmem:[#allocation5 + $0x10] sm:$0xff]
    %v52 = vld [vmem:[#allocation5 + $0x18] sm:$0xff]
    %v53 = vld [vmem:[%s2] sm:$0x1]
    %v55 = vperm.slane %v53, 0
    %vm57 = vcmask 261120
    %v59 = vsel %vm57, %v47, 0
    %v62 = vsel %vm57, %v48, 0
    %64 = vmatpush.msra.mxu0 0.0
    %65 = vmatpush.msra.mxu0 0.0
    %66 = vmatpush.msra.mxu0 0.0
    %67 = vmatpush.msra.mxu0 0.0
    %68 = vmatpush.msra.mxu0 0.0
    %69 = vmatpush.msra.mxu0 0.0
    %70 = vmatpush.msra.mxu0 0.0
    %71 = vmatpush.msra.mxu0 0.0
    %72 = vmatpush.msra.mxu0 0.0
    %73 = vmatpush.msra.mxu0 0.0
    %74 = vmatpush.msra.mxu0 0.0
    %75 = vmatpush.msra.mxu0 0.0
    %76 = vmatpush.msra.mxu0 %v52
    %77 = vmatpush.msra.mxu0 %v51
    %78 = vmatpush.msra.mxu0 %v50
    %79 = vmatpush.msra.mxu0 %v49
    %80 = vmatmul.f32.gmra.mxu0 %v59
    %v81 = vpop.f32.mrf.mxu0
    %v82 = vadd.f32 %v55, %v81
    %83 = vmatmul.f32.gmra.mxu0 %v62
    %v84 = vpop.f32.mrf.mxu0
    %v85 = vadd.f32 %v55, %v84
    %86 = vdwg.mxu0
    %vm87 = vcmask 785408
    %88 = vst.msk [vmem:[#allocation7] sm:$0xff] %vm87, %v82
    %89 = vst.msk [vmem:[#allocation7 + $0x8] sm:$0xff] %vm87, %v85
    // Predicated region
    $region22: #{tpu_custom_call.1} parent=1 // pred_check
      _
    $region23: #{tpu_custom_call.1} parent=1 // pred_check_branch
      %91 = sbr.rel (0) target = $region25
    $region24: #{tpu_custom_call.1} parent=1 // pred_region
      %93 = vsyncadd [#allocation4], 0
      %s94 = sshll.u32 [#allocation7], 4
      %s95 = int_to_ptr.vmem [resolvable:$true] %s94
      %s96 = sshll.u32 %s3, 4
      %s97 = int_to_ptr.hbm [resolvable:$true] %s96
      %102 = dma.vmem_to_hbm [thread:$0]  %s95, 256, %s97, [#allocation4], 128, 128, 8
    $region25: #{tpu_custom_call.1} parent=1 // pred_fallthru
      _
    // Predicated region
    $region26: #{tpu_custom_call.1} parent=1 // pred_check
      _
    $region27: #{tpu_custom_call.1} parent=1 // pred_check_branch
      %104 = sbr.rel (0) target = $region29
    $region28: #{tpu_custom_call.1} parent=1 // pred_region
      %106 = dma.done [#allocation4], 256
    $region29: #{tpu_custom_call.1} parent=1 // pred_fallthru
      _
    %107 = vsyncpa [#allocation3], 1
    %108 = vsyncpa [#allocation6], 1
    %109 = vsyncpa [#allocation4], 1

</llo_original>
